<compile_context>
chip_gen: v7x
topology: tpu7x:2x2x1
jax: 0.10.0
libtpu: 0.0.40
codegen_flags: <defaults>
</compile_context>

<pallas_src>
import jax
import jax.numpy as jnp
from jax.experimental import pallas as pl
from jax.experimental.pallas import tpu as pltpu

_LANES = 128
_SUBLANES = 8
_MAX_BLOCK_ROWS = 2048  # 2048 x 128 f32 = 1 MiB per input tile


def _sublane_multiple(dtype) -> int:
    """Rows-per-sublane-tile for a dtype (8 for 32-bit, 16 for 16-bit, 32 for 8-bit)."""
    itemsize = jnp.dtype(dtype).itemsize
    return max(_SUBLANES, (_SUBLANES * 4) // itemsize)


def _make_partial_sq_sum_kernel(rows_valid, block_rows, n_cols):
    """Each grid step: sum of (a-b)^2 over its tile, emitted as an (8, n_cols) slab."""
    n_slabs = block_rows // _SUBLANES

    def kernel(a_ref, b_ref, o_ref):
        i = pl.program_id(0)
        last = pl.num_programs(0) - 1

        # Upcast in-kernel so the HBM->VMEM DMA moves the narrow dtype.
        d = a_ref[...].astype(jnp.float32) - b_ref[...].astype(jnp.float32)
        sq = d * d

        def write(v):
            # (block_rows, n_cols) -> (n_slabs, 8, n_cols) is sublane-contiguous
            # (no (8,128) tile boundary crossed); summing over slabs is a chain
            # of cheap full-vreg VPU adds, leaving only an (8, n_cols) store.
            o_ref[...] = v.reshape(n_slabs, _SUBLANES, n_cols).sum(axis=0)[None]

        @pl.when(i < last)
        def _():
            write(sq)

        @pl.when(i == last)
        def _():
            # Only the final block can read past the end of the array (Pallas
            # pads the edge block with unspecified data); mask those rows out.
            row_ids = jax.lax.broadcasted_iota(
                jnp.int32, (block_rows, n_cols), 0)
            valid = (i * block_rows + row_ids) < rows_valid
            write(jnp.where(valid, sq, jnp.float32(0.0)))

    return kernel


def channel_mse_loss(x_hat, x, reduction="mean"):
    """ChannelMSELoss forward. Returns a scalar for reduction in {'mean','sum'}."""
    assert x_hat.shape == x.shape
    n, c = x.shape[0], x.shape[1]
    total = int(x.size)
    spatial = total // (n * c)

    # Keep native dtype through the DMA when possible; only promote in the
    # wrapper if the two inputs disagree.
    if x_hat.dtype != x.dtype:
        x_hat = x_hat.astype(jnp.float32)
        x = x.astype(jnp.float32)

    a = x_hat.reshape(-1)
    b = x.reshape(-1)

    sub_mult = _sublane_multiple(a.dtype)
    align = sub_mult * _LANES
    padded_total = pl.cdiv(total, align) * align
    if padded_total != total:
        # Padded zeros contribute exactly 0 to the squared-error sum.
        a = jnp.pad(a, (0, padded_total - total))
        b = jnp.pad(b, (0, padded_total - total))

    rows = padded_total // _LANES  # multiple of sub_mult
    a = a.reshape(rows, _LANES)
    b = b.reshape(rows, _LANES)

    block_rows = min(_MAX_BLOCK_ROWS, rows)  # both multiples of sub_mult
    n_chunks = pl.cdiv(rows, block_rows)

    partials = pl.pallas_call(
        _make_partial_sq_sum_kernel(rows, block_rows, _LANES),
        out_shape=jax.ShapeDtypeStruct((n_chunks, _SUBLANES, _LANES), jnp.float32),
        grid_spec=pltpu.PrefetchScalarGridSpec(
            num_scalar_prefetch=0,
            grid=(n_chunks,),
            in_specs=[
                pl.BlockSpec((block_rows, _LANES), lambda i: (i, 0)),
                pl.BlockSpec((block_rows, _LANES), lambda i: (i, 0)),
            ],
            out_specs=pl.BlockSpec((1, _SUBLANES, _LANES), lambda i: (i, 0, 0)),
        ),
        compiler_params=pltpu.CompilerParams(
            dimension_semantics=("parallel",)),
    )(a, b)

    total_sq = jnp.sum(partials)  # tiny (n_chunks, 8, 128) reduce in XLA
    if reduction == "mean":
        return total_sq / jnp.float32(total)
    if reduction == "sum":
        return total_sq / jnp.float32(spatial)
    # TODO(synk): reduction='none' (per-(N,C) output map) not implemented in the Pallas path.
    raise NotImplementedError("reduction='none' is not implemented")


def _ref_channel_mse(x_hat, x, reduction="mean"):
    """Pure-JAX reference mirroring the PyTorch module."""
    xr = x.reshape(x.shape[0], x.shape[1], -1).astype(jnp.float32)
    xh = x_hat.reshape(x_hat.shape[0], x_hat.shape[1], -1).astype(jnp.float32)
    loss = jnp.mean((xr - xh) ** 2, axis=2)
    if reduction == "mean":
        return jnp.mean(loss)
    if reduction == "sum":
        return jnp.sum(loss)
    return loss


if __name__ == "__main__":
    key = jax.random.PRNGKey(0)
    k1, k2 = jax.random.split(key)

    # Main case: NCHW f32
    shape = (2, 4, 16, 16)
    x_hat = jax.random.normal(k1, shape, jnp.float32)
    x = jax.random.normal(k2, shape, jnp.float32)

    out = channel_mse_loss(x_hat, x)
    jax.block_until_ready(out)
    ref = _ref_channel_mse(x_hat, x)
    assert jnp.allclose(out, ref, rtol=1e-5, atol=1e-6), (float(out), float(ref))

    # 'sum' reduction path
    out_sum = channel_mse_loss(x_hat, x, reduction="sum")
    ref_sum = _ref_channel_mse(x_hat, x, reduction="sum")
    assert jnp.allclose(out_sum, ref_sum, rtol=1e-5, atol=1e-5), (
        float(out_sum), float(ref_sum))

    # Unaligned element count (exercises the tail-pad + mask path)
    shape2 = (2, 3, 5, 7)
    y_hat = jax.random.normal(k1, shape2, jnp.float32)
    y = jax.random.normal(k2, shape2, jnp.float32)
    out2 = channel_mse_loss(y_hat, y)
    ref2 = _ref_channel_mse(y_hat, y)
    assert jnp.allclose(out2, ref2, rtol=1e-5, atol=1e-6), (float(out2), float(ref2))

    # bf16 inputs (exercise in-kernel upcast + 16-row sublane alignment)
    z_hat = x_hat.astype(jnp.bfloat16)
    z = x.astype(jnp.bfloat16)
    out3 = channel_mse_loss(z_hat, z)
    ref3 = _ref_channel_mse(z_hat, z)
    assert jnp.allclose(out3, ref3, rtol=1e-2, atol=1e-2), (float(out3), float(ref3))

    print("KERNEL_OK")
</pallas_src>

<mosaic_0001>
module attributes {stable_mosaic.version = 11 : i64} {
  func.func @kernel(%arg0: i32, %arg1: memref<16x128xf32, #tpu.memory_space<vmem>>, %arg2: memref<16x128xf32, #tpu.memory_space<vmem>>, %arg3: memref<1x8x128xf32, #tpu.memory_space<vmem>>) attributes {dimension_semantics = [#tpu.dimension_semantics<parallel>], iteration_bounds = array<i64: 1>, scalar_prefetch = 0 : i64, scratch_operands = 0 : i64, tpu.core_type = #tpu.core_type<tc>, window_params = [{transform_indices = @transform_0, window_bounds = array<i64: 16, 128>}, {transform_indices = @transform_1, window_bounds = array<i64: 16, 128>}, {transform_indices = @transform_2, window_bounds = array<i64: 1, 8, 128>}]} {
    %c0 = arith.constant 0 : index
    %c0_0 = arith.constant 0 : index
    %0 = vector.load %arg1[%c0, %c0_0] : memref<16x128xf32, #tpu.memory_space<vmem>>, vector<16x128xf32>
    %c0_1 = arith.constant 0 : index
    %c0_2 = arith.constant 0 : index
    %1 = vector.load %arg2[%c0_1, %c0_2] : memref<16x128xf32, #tpu.memory_space<vmem>>, vector<16x128xf32>
    %2 = arith.subf %0, %1 : vector<16x128xf32>
    %3 = arith.mulf %2, %2 : vector<16x128xf32>
    %c0_i32 = arith.constant 0 : i32
    %4 = arith.cmpi slt, %arg0, %c0_i32 : i32
    %5 = arith.extui %4 : i1 to i32
    %c0_i32_3 = arith.constant 0 : i32
    %6 = arith.cmpi ne, %5, %c0_i32_3 : i32
    scf.if %6 {
      %10 = vector.shape_cast %3 : vector<16x128xf32> to vector<2x8x128xf32>
      %cst = arith.constant dense<0.000000e+00> : vector<8x128xf32>
      %11 = vector.multi_reduction <add>, %10, %cst [0] : vector<2x8x128xf32> to vector<8x128xf32>
      %12 = vector.shape_cast %11 : vector<8x128xf32> to vector<1x8x128xf32>
      %c0_6 = arith.constant 0 : index
      %c0_7 = arith.constant 0 : index
      %c0_8 = arith.constant 0 : index
      %13 = vector.load %arg3[%c0_6, %c0_7, %c0_8] : memref<1x8x128xf32, #tpu.memory_space<vmem>>, vector<1x8x128xf32>
      tpu.vector_store %arg3[%c0_6, %c0_7, %c0_8], %12 {strides = array<i32>} : memref<1x8x128xf32, #tpu.memory_space<vmem>>, vector<1x8x128xf32>,
    } else {
    }
    %c0_i32_4 = arith.constant 0 : i32
    %7 = arith.cmpi eq, %arg0, %c0_i32_4 : i32
    %8 = arith.extui %7 : i1 to i32
    %c0_i32_5 = arith.constant 0 : i32
    %9 = arith.cmpi ne, %8, %c0_i32_5 : i32
    scf.if %9 {
      %10 = tpu.iota {dimensions = array<i32: 0>} : vector<16x128xi32>
      %c16_i32 = arith.constant 16 : i32
      %11 = arith.muli %arg0, %c16_i32 : i32
      %12 = vector.broadcast %11 : i32 to vector<16x128xi32>
      %13 = arith.addi %12, %10 : vector<16x128xi32>
      %c16_i32_6 = arith.constant 16 : i32
      %14 = vector.broadcast %c16_i32_6 : i32 to vector<16x128xi32>
      %15 = arith.cmpi slt, %13, %14 : vector<16x128xi32>
      %cst = arith.constant 0.000000e+00 : f32
      %16 = vector.broadcast %cst : f32 to vector<16x128xf32>
      %17 = arith.select %15, %3, %16 : vector<16x128xi1>, vector<16x128xf32>
      %18 = vector.shape_cast %17 : vector<16x128xf32> to vector<2x8x128xf32>
      %cst_7 = arith.constant dense<0.000000e+00> : vector<8x128xf32>
      %19 = vector.multi_reduction <add>, %18, %cst_7 [0] : vector<2x8x128xf32> to vector<8x128xf32>
      %20 = vector.shape_cast %19 : vector<8x128xf32> to vector<1x8x128xf32>
      %c0_8 = arith.constant 0 : index
      %c0_9 = arith.constant 0 : index
      %c0_10 = arith.constant 0 : index
      %21 = vector.load %arg3[%c0_8, %c0_9, %c0_10] : memref<1x8x128xf32, #tpu.memory_space<vmem>>, vector<1x8x128xf32>
      tpu.vector_store %arg3[%c0_8, %c0_9, %c0_10], %20 {strides = array<i32>} : memref<1x8x128xf32, #tpu.memory_space<vmem>>, vector<1x8x128xf32>,
    } else {
    }
    return
  }
  func.func @transform_0(%arg0: i32) -> (i32, i32) {
    %c0_i32 = arith.constant 0 : i32
    %c0_i32_0 = arith.constant 0 : i32
    return %arg0, %c0_i32 : i32, i32
  }
  func.func @transform_1(%arg0: i32) -> (i32, i32) {
    %c0_i32 = arith.constant 0 : i32
    %c0_i32_0 = arith.constant 0 : i32
    return %arg0, %c0_i32 : i32, i32
  }
  func.func @transform_2(%arg0: i32) -> (i32, i32, i32) {
    %c0_i32 = arith.constant 0 : i32
    %c0_i32_0 = arith.constant 0 : i32
    %c0_i32_1 = arith.constant 0 : i32
    return %arg0, %c0_i32, %c0_i32_0 : i32, i32, i32
  }
}

</mosaic_0001>

<llo_original>
// kernel: tpu_custom_call.1
$region0: #{tpu_custom_call.1}
  #allocation0 [shape = 'u32[]', space=smem, size = 0x4, offset = 0x4, fixed_abs, tag = 'smem constant byte address 0x4 - core index']
  #allocation1 [shape = 'u32[144,128]{1,0:T(1,128)}', space=vmem, size = 0x12000, scoped, tag = 'internal scratch']
  %s0 = inlined_call_operand.hbm [shape: f32[16,128], index: 0, kind: input, shape index: {}]
  %s1 = inlined_call_operand.hbm [shape: f32[16,128], index: 1, kind: input, shape index: {}]
  %s2 = inlined_call_operand.hbm [shape: f32[1,8,128], index: 2, kind: output, shape index: {}]
  %s3 = sld [smem:[#allocation0]]
  $region34: #{tpu_custom_call.1} parent=0
    _
  %s5 = ssub.s32 1, %s3
  %s6 = scalar_select 0, %s5, %s3
  $region1: #{tpu_custom_call.1} parent=0
    #allocation2 [shape = 'u8[8192]{0}', space=vmem, size = 0x2000, scoped, tag = 'input window, operand 0, single buffered']
    #allocation3 [shape = 's32[1]{0}', space=sflag, size = 0x4, scoped, tag = 'scoped memory for tpu_custom_call.1']
    #allocation4 [shape = 's32[1]{0}', space=sflag, size = 0x4, scoped, tag = 'scoped memory for tpu_custom_call.1']
    #allocation5 [shape = 'u8[8192]{0}', space=vmem, size = 0x2000, scoped, tag = 'input window, operand 1, single buffered']
    #allocation6 [shape = 's32[1]{0}', space=sflag, size = 0x4, scoped, tag = 'scoped memory for tpu_custom_call.1']
    #allocation7 [shape = 'u8[4096]{0}', space=vmem, size = 0x1000, scoped, tag = 'output window, operand 0, single buffered']
    %7 = vsyncpa [#allocation3], 0
    %8 = vsyncpa [#allocation6], 0
    %9 = vsyncpa [#allocation4], 0
    // Predicated region
    $region2: #{tpu_custom_call.1} parent=1 // pred_check
      _
    $region3: #{tpu_custom_call.1} parent=1 // pred_check_branch
      %11 = sbr.rel (0) target = $region5
    $region4: #{tpu_custom_call.1} parent=1 // pred_region
      %s13 = ssub.s32 256, 256
      %14 = vsyncadd [#allocation3], %s13
      %s15 = sshll.u32 [#allocation2], 4
      %s16 = int_to_ptr.vmem [resolvable:$true] %s15
      %21 = dma.hbm_to_vmem [thread:$0]  %s0, 256, %s16, [#allocation3], 128, 128, 8
    $region5: #{tpu_custom_call.1} parent=1 // pred_fallthru
      _
    // Predicated region
    $region6: #{tpu_custom_call.1} parent=1 // pred_check
      _
    $region7: #{tpu_custom_call.1} parent=1 // pred_check_branch
      %23 = sbr.rel (0) target = $region9
    $region8: #{tpu_custom_call.1} parent=1 // pred_region
      %s25 = ssub.s32 256, 256
      %26 = vsyncadd [#allocation6], %s25
      %s27 = sshll.u32 [#allocation5], 4
      %s28 = int_to_ptr.vmem [resolvable:$true] %s27
      %33 = dma.hbm_to_vmem [thread:$0]  %s1, 256, %s28, [#allocation6], 128, 128, 8
    $region9: #{tpu_custom_call.1} parent=1 // pred_fallthru
      _
    // Predicated region
    $region10: #{tpu_custom_call.1} parent=1 // pred_check
      _
    $region11: #{tpu_custom_call.1} parent=1 // pred_check_branch
      %35 = sbr.rel (0) target = $region13
    $region12: #{tpu_custom_call.1} parent=1 // pred_region
      %36 = dma.done [#allocation3], 256
    $region13: #{tpu_custom_call.1} parent=1 // pred_fallthru
      _
    // Predicated region
    $region14: #{tpu_custom_call.1} parent=1 // pred_check
      _
    $region15: #{tpu_custom_call.1} parent=1 // pred_check_branch
      %38 = sbr.rel (0) target = $region17
    $region16: #{tpu_custom_call.1} parent=1 // pred_region
      %39 = dma.done [#allocation6], 256
    $region17: #{tpu_custom_call.1} parent=1 // pred_fallthru
      _
    %v40 = vld [vmem:[#allocation2] sm:$0xff]
    %v41 = vld [vmem:[#allocation2 + $0x8] sm:$0xff]
    %v42 = vld [vmem:[#allocation5] sm:$0xff]
    %v43 = vld [vmem:[#allocation5 + $0x8] sm:$0xff]
    %v44 = vsub.f32 %v40, %v42
    %v45 = vsub.f32 %v41, %v43
    %v46 = vmul.f32 %v44, %v44
    %v47 = vmul.f32 %v45, %v45
    %p48 = scmp.lt.s32.totalorder 0, 0
    // Predicated region
    $region18: #{tpu_custom_call.1} parent=1 // pred_check
      %p49 = pneg %p48
    $region19: #{tpu_custom_call.1} parent=1 // pred_check_branch
      %51 = sbr.rel (%p49) target = $region21
    $region20: #{tpu_custom_call.1} parent=1 // pred_region
      %v52 = vadd.f32 %v46, %v47
      %53 = vst [vmem:[#allocation7] sm:$0xff] %v52
    $region21: #{tpu_custom_call.1} parent=1 // pred_fallthru
      _
    %p54 = scmp.eq.s32.totalorder 0, 0
    // Predicated region
    $region22: #{tpu_custom_call.1} parent=1 // pred_check
      %p55 = pneg %p54
    $region23: #{tpu_custom_call.1} parent=1 // pred_check_branch
      %57 = sbr.rel (%p55) target = $region25
    $region24: #{tpu_custom_call.1} parent=1 // pred_region
      %v58 = vlaneseq
      %v59 = vshrl.u32 %v58, 7
      %v60 = vadd.s32 %v59, 8
      %s61 = smul.u32 0, 16
      %v62 = vstv %s61
      %v63 = vadd.s32 %v62, %v59
      %v64 = vadd.s32 %v62, %v60
      %vm65 = vcmp.lt.s32.totalorder %v63, 16
      %vm66 = vcmp.lt.s32.totalorder %v64, 16
      %v67 = vsel %vm65, %v46, 0.0
      %v68 = vsel %vm66, %v47, 0.0
      %v69 = vadd.f32 %v67, %v68
      %70 = vst [vmem:[#allocation7] sm:$0xff] %v69
    $region25: #{tpu_custom_call.1} parent=1 // pred_fallthru
      _
    // Predicated region
    $region26: #{tpu_custom_call.1} parent=1 // pred_check
      _
    $region27: #{tpu_custom_call.1} parent=1 // pred_check_branch
      %72 = sbr.rel (0) target = $region29
    $region28: #{tpu_custom_call.1} parent=1 // pred_region
      %s74 = ssub.s32 128, 128
      %75 = vsyncadd [#allocation4], %s74
      %s77 = sshll.u32 [#allocation7], 4
      %s78 = int_to_ptr.vmem [resolvable:$true] %s77
      %80 = dma.vmem_to_hbm [thread:$0]  %s78, 128, %s2, [#allocation4]
    $region29: #{tpu_custom_call.1} parent=1 // pred_fallthru
      _
    // Predicated region
    $region30: #{tpu_custom_call.1} parent=1 // pred_check
      _
    $region31: #{tpu_custom_call.1} parent=1 // pred_check_branch
      %82 = sbr.rel (0) target = $region33
    $region32: #{tpu_custom_call.1} parent=1 // pred_region
      %83 = dma.done [#allocation4], 128
    $region33: #{tpu_custom_call.1} parent=1 // pred_fallthru
      _
    %84 = vsyncpa [#allocation3], 1
    %85 = vsyncpa [#allocation6], 1
    %86 = vsyncpa [#allocation4], 1

</llo_original>
